<compile_context>
chip_gen: v7x
topology: tpu7x:2x2x1
jax: 0.10.0
libtpu: 0.0.40
codegen_flags: <defaults>
</compile_context>

<pallas_src>
import functools
import math

import jax
import jax.numpy as jnp
from jax.experimental import pallas as pl
from jax.experimental.pallas import tpu as pltpu

_SUBLANES = 8
_LANES = 128


def _corner_kernel(o_ref, t_ref, g_ref, out_ref, *,
                   neg_w_hi, rows_total, row_block, n_inner,
                   chunk_rows, n_chunks, unroll, needs_mask):
    """Streams one (row_block, W) block of each input.

    out_ref is the (3, chunk_rows, W) resident accumulator for this parallel slice:
      row 0: running sum of weighted-BCE values
      row 1: running count of correct positives  ((o >= 0.5) & (t == 1))
      row 2: running count of positives          (t == 1)
    """
    i = pl.program_id(0)
    j = pl.program_id(1)

    @pl.when(j == 0)
    def _init():
        out_ref[...] = jnp.zeros_like(out_ref)

    # Unclamped global block index.  The DMA index_map clamps it, so grid points
    # past the last real block simply re-read that block and fully mask here.
    base_row = (i * n_inner + j) * row_block
    if needs_mask:
        row_iota = jax.lax.broadcasted_iota(jnp.int32, (chunk_rows, 1), 0)

    def body(c, carry):
        bce_acc, cor_acc, pos_acc = carry
        r0 = pl.multiple_of(c * chunk_rows, chunk_rows)
        o = o_ref[pl.ds(r0, chunk_rows), :].astype(jnp.float32)
        t = t_ref[pl.ds(r0, chunk_rows), :].astype(jnp.float32)
        g = g_ref[pl.ds(r0, chunk_rows), :].astype(jnp.float32)

        # ---- recall counts (t==1 positives; correct when also o>=0.5) ------
        pos_m = t == 1.0
        if needs_mask:
            valid = (base_row + r0 + row_iota) < rows_total      # (chunk_rows, 1)
            pos_m = jnp.logical_and(pos_m, valid)
        pos = jnp.where(pos_m, 1.0, 0.0)
        cor = jnp.where(o >= 0.5, pos, 0.0)

        # ---- weighted BCE (torch clamps log terms at -100); the leading
        # negation is folded into the weight ---------------------------------
        w_neg = jnp.where(g > 0.5, neg_w_hi, -1.0)
        log_o = jnp.maximum(jnp.log(o), -100.0)
        log_1mo = jnp.maximum(jnp.log(1.0 - o), -100.0)
        bce = w_neg * (g * (log_o - log_1mo) + log_1mo)
        if needs_mask:
            # Select (not multiply): garbage rows may hold NaN/Inf.
            bce = jnp.where(valid, bce, 0.0)

        return bce_acc + bce, cor_acc + cor, pos_acc + pos

    zero = jnp.zeros((chunk_rows, o_ref.shape[1]), jnp.float32)
    bce_acc, cor_acc, pos_acc = jax.lax.fori_loop(
        0, n_chunks, body, (zero, zero, zero), unroll=unroll)

    out_ref[0] += bce_acc
    out_ref[1] += cor_acc
    out_ref[2] += pos_acc


def _vmem_capacity_bytes():
    try:
        info = pltpu.get_tpu_info()
        cap = getattr(info, "vmem_capacity_bytes", None)
        if cap:
            return int(cap)
    except Exception:
        pass
    return 64 << 20          # conservative fallback: v7x per-TensorCore VMEM


def corner_criterion(outputs_s1, targets, gauss_targets, loss_rate=9.0,
                     block_bytes=None, vmem_limit_bytes=None, max_parallel=2):
    """Returns (loss_s1, recall_s1) exactly as the PyTorch module.

    NOTE: recall_s1 is NaN when `targets` has no positives (matches PyTorch).
    targets / gauss_targets may be passed as bf16/int8 to cut HBM traffic; the
    kernel upcasts to f32 after the VMEM load.
    """
    shape = outputs_s1.shape
    total = int(math.prod(shape))
    # .sum(-1).sum(-1).mean() == total_sum / prod(all dims except the last two)
    mean_denom = int(math.prod(shape[:-2])) if len(shape) > 2 else 1

    # Zero-copy, layout-preserving 2-D view of all three tensors (no padding).
    if total % _LANES == 0:
        R, W = total // _LANES, _LANES                  # lane-dense fast path
    elif len(shape) >= 2:
        R, W = int(math.prod(shape[:-1])), int(shape[-1])
    else:
        R, W = 1, total
    o2 = outputs_s1.reshape(R, W)
    t2 = targets.reshape(R, W)
    g2 = gauss_targets.reshape(R, W)

    # Per-generation sizing (v5e/v6e: 128 MiB VMEM, v7x: 64 MiB per TC).
    cap = _vmem_capacity_bytes()
    big_vmem = cap >= (100 << 20)
    if block_bytes is None:
        block_bytes = (8 << 20) if big_vmem else (4 << 20)
    if vmem_limit_bytes is None:
        vmem_limit_bytes = (64 << 20) if big_vmem else (48 << 20)

    # Row-block sizing: multiples of 8 sublanes targeting ~block_bytes per input.
    if R < _SUBLANES:
        row_block, chunk_rows = R, R
    else:
        rb = max(_SUBLANES, (block_bytes // (W * 4)) // _SUBLANES * _SUBLANES)
        row_block = min(rb, (R // _SUBLANES) * _SUBLANES)
        chunk_rows = _SUBLANES
    num_blocks = -(-R // row_block)

    # Parallel axis only when there is enough work to shard across TensorCores
    # (avoids dead/rounded blocks on single-TC chips and tiny inputs).
    num_par = max_parallel if (max_parallel > 1 and num_blocks >= 8) else 1
    n_inner = -(-num_blocks // num_par)
    n_chunks = -(-row_block // chunk_rows)
    unroll = min(8, n_chunks)

    # Masking only needed when something is ragged; otherwise skip the extra ops.
    needs_mask = (R % row_block != 0) or (num_par * n_inner != num_blocks) \
        or (row_block % chunk_rows != 0)

    last_block = num_blocks - 1

    def in_index(i, j):
        return (jnp.minimum(i * n_inner + j, last_block), 0)

    in_spec = pl.BlockSpec((row_block, W), in_index)
    out_spec = pl.BlockSpec((3, chunk_rows, W), lambda i, j: (i, 0, 0))

    kernel = functools.partial(
        _corner_kernel,
        neg_w_hi=-(float(loss_rate) + 1.0),
        rows_total=R, row_block=row_block, n_inner=n_inner,
        chunk_rows=chunk_rows, n_chunks=n_chunks, unroll=unroll,
        needs_mask=needs_mask)

    partials = pl.pallas_call(
        kernel,
        out_shape=jax.ShapeDtypeStruct((3 * num_par, chunk_rows, W), jnp.float32),
        grid=(num_par, n_inner),
        in_specs=[in_spec, in_spec, in_spec],
        out_specs=out_spec,
        compiler_params=pltpu.CompilerParams(
            dimension_semantics=("parallel", "arbitrary"),
            vmem_limit_bytes=vmem_limit_bytes),
    )(o2, t2, g2)

    # Tiny scalar glue on a few KiB of partials, outside the kernel.
    partials = partials.reshape(num_par, 3, chunk_rows, W)
    loss_s1 = jnp.sum(partials[:, 0]) / jnp.float32(mean_denom)
    correct = jnp.sum(partials[:, 1])
    pos = jnp.sum(partials[:, 2])
    recall_s1 = correct / pos            # NaN if no positives, as in PyTorch
    return loss_s1, recall_s1


def _reference(outputs_s1, targets, gauss_targets, loss_rate=9.0):
    """Pure-JAX reference mirroring the PyTorch forward."""
    preds = (outputs_s1 >= 0.5).astype(jnp.float32)
    pos_mask = targets == 1.0
    correct = jnp.sum(jnp.where(pos_mask, (preds == targets).astype(jnp.float32), 0.0))
    recall = correct / jnp.sum(pos_mask.astype(jnp.float32))
    w = (gauss_targets > 0.5).astype(jnp.float32) * loss_rate + 1.0
    log_o = jnp.maximum(jnp.log(outputs_s1), -100.0)
    log_1mo = jnp.maximum(jnp.log(1.0 - outputs_s1), -100.0)
    bce = -w * (gauss_targets * log_o + (1.0 - gauss_targets) * log_1mo)
    loss = jnp.mean(jnp.sum(bce, axis=(-1, -2)))
    return loss, recall


if __name__ == "__main__":
    def make_inputs(key, shape):
        k1, k2, k3 = jax.random.split(key, 3)
        outputs = jax.nn.sigmoid(jax.random.normal(k1, shape, jnp.float32))
        targets = (jax.random.uniform(k2, shape) > 0.9).astype(jnp.float32)
        gauss = jax.random.uniform(k3, shape, jnp.float32)
        return outputs, targets, gauss

    def check(shape, key, rtol, atol, **kw):
        o, t, g = make_inputs(key, shape)
        loss, recall = corner_criterion(o, t, g, **kw)
        jax.block_until_ready((loss, recall))
        ref_loss, ref_recall = _reference(o, t, g)
        assert jnp.allclose(loss, ref_loss, rtol=rtol, atol=atol), (shape, loss, ref_loss)
        assert jnp.allclose(recall, ref_recall, rtol=1e-6, atol=1e-6), (shape, recall, ref_recall)

    key = jax.random.PRNGKey(0)
    k1, k2, k3, k4 = jax.random.split(key, 4)

    # Small corner-heatmap shape [B, H, W]; single block, lane-dense fast path.
    check((2, 16, 16), k1, rtol=1e-5, atol=1e-4)

    # Default hardware-sized blocks on a larger heatmap (no masking path).
    check((2, 128, 128), k2, rtol=1e-4, atol=1e-3)

    # Forced small blocks: multi-block grid, parallel axis across cores, ragged
    # final block and one clamped/masked dead grid step (11 blocks on a 2x6 grid).
    check((2, 128, 128), k3, rtol=1e-4, atol=1e-3, block_bytes=12 * 1024)

    # Awkward shape: element count not a multiple of 128 -> natural-last-dim
    # fallback path with in-kernel row masking (still no padding copies).
    check((2, 10, 13), k4, rtol=1e-5, atol=1e-4)

    print("KERNEL_OK")
</pallas_src>

<mosaic_0001>
module attributes {stable_mosaic.version = 11 : i64} {
  func.func @_corner_kernel(%arg0: i32, %arg1: i32, %arg2: memref<4x128xf32, #tpu.memory_space<vmem>>, %arg3: memref<4x128xf32, #tpu.memory_space<vmem>>, %arg4: memref<4x128xf32, #tpu.memory_space<vmem>>, %arg5: memref<3x4x128xf32, #tpu.memory_space<vmem>>) attributes {dimension_semantics = [#tpu.dimension_semantics<parallel>, #tpu.dimension_semantics<arbitrary>], iteration_bounds = array<i64: 1, 1>, scalar_prefetch = 0 : i64, scratch_operands = 0 : i64, tpu.core_type = #tpu.core_type<tc>, window_params = [{transform_indices = @transform_0, window_bounds = array<i64: 4, 128>}, {transform_indices = @transform_1, window_bounds = array<i64: 4, 128>}, {transform_indices = @transform_2, window_bounds = array<i64: 4, 128>}, {transform_indices = @transform_3, window_bounds = array<i64: 3, 4, 128>}]} {
    %c0_i32 = arith.constant 0 : i32
    %0 = arith.cmpi eq, %arg1, %c0_i32 : i32
    %1 = arith.extui %0 : i1 to i32
    %c0_i32_0 = arith.constant 0 : i32
    %2 = arith.cmpi ne, %1, %c0_i32_0 : i32
    scf.if %2 {
      %cst_31 = arith.constant 0.000000e+00 : f32
      %59 = vector.broadcast %cst_31 : f32 to vector<3x4x128xf32>
      %c0_32 = arith.constant 0 : index
      %c0_33 = arith.constant 0 : index
      %c0_34 = arith.constant 0 : index
      %60 = vector.load %arg5[%c0_32, %c0_33, %c0_34] : memref<3x4x128xf32, #tpu.memory_space<vmem>>, vector<3x4x128xf32>
      tpu.vector_store %arg5[%c0_32, %c0_33, %c0_34], %59 {strides = array<i32>} : memref<3x4x128xf32, #tpu.memory_space<vmem>>, vector<3x4x128xf32>,
    } else {
    }
    %cst = arith.constant 0.000000e+00 : f32
    %3 = vector.broadcast %cst : f32 to vector<4x128xf32>
    %c0_i32_1 = arith.constant 0 : i32
    %c4_i32 = arith.constant 4 : i32
    %4 = arith.muli %c0_i32_1, %c4_i32 : i32
    %5 = tpu.assume_multiple %4, 4 : i32
    %6 = arith.index_cast %5 : i32 to index
    %c0 = arith.constant 0 : index
    %7 = vector.load %arg2[%6, %c0] : memref<4x128xf32, #tpu.memory_space<vmem>>, vector<4x128xf32>
    %8 = arith.index_cast %5 : i32 to index
    %c0_2 = arith.constant 0 : index
    %9 = vector.load %arg3[%8, %c0_2] : memref<4x128xf32, #tpu.memory_space<vmem>>, vector<4x128xf32>
    %10 = arith.index_cast %5 : i32 to index
    %c0_3 = arith.constant 0 : index
    %11 = vector.load %arg4[%10, %c0_3] : memref<4x128xf32, #tpu.memory_space<vmem>>, vector<4x128xf32>
    %cst_4 = arith.constant 1.000000e+00 : f32
    %12 = vector.broadcast %cst_4 : f32 to vector<4x128xf32>
    %13 = arith.cmpf oeq, %9, %12 : vector<4x128xf32>
    %cst_5 = arith.constant 1.000000e+00 : f32
    %cst_6 = arith.constant 0.000000e+00 : f32
    %14 = vector.broadcast %cst_5 : f32 to vector<4x128xf32>
    %15 = vector.broadcast %cst_6 : f32 to vector<4x128xf32>
    %16 = arith.select %13, %14, %15 : vector<4x128xi1>, vector<4x128xf32>
    %cst_7 = arith.constant 5.000000e-01 : f32
    %17 = vector.broadcast %cst_7 : f32 to vector<4x128xf32>
    %18 = arith.cmpf oge, %7, %17 : vector<4x128xf32>
    %cst_8 = arith.constant 0.000000e+00 : f32
    %19 = vector.broadcast %cst_8 : f32 to vector<4x128xf32>
    %20 = arith.select %18, %16, %19 : vector<4x128xi1>, vector<4x128xf32>
    %cst_9 = arith.constant 5.000000e-01 : f32
    %21 = vector.broadcast %cst_9 : f32 to vector<4x128xf32>
    %22 = arith.cmpf ogt, %11, %21 : vector<4x128xf32>
    %cst_10 = arith.constant -1.000000e+01 : f32
    %cst_11 = arith.constant -1.000000e+00 : f32
    %23 = vector.broadcast %cst_10 : f32 to vector<4x128xf32>
    %24 = vector.broadcast %cst_11 : f32 to vector<4x128xf32>
    %25 = arith.select %22, %23, %24 : vector<4x128xi1>, vector<4x128xf32>
    %26 = math.log %7 : vector<4x128xf32>
    %cst_12 = arith.constant -1.000000e+02 : f32
    %27 = vector.broadcast %cst_12 : f32 to vector<4x128xf32>
    %28 = arith.maximumf %26, %27 : vector<4x128xf32>
    %cst_13 = arith.constant 1.000000e+00 : f32
    %29 = vector.broadcast %cst_13 : f32 to vector<4x128xf32>
    %30 = arith.subf %29, %7 : vector<4x128xf32>
    %31 = math.log %30 : vector<4x128xf32>
    %cst_14 = arith.constant -1.000000e+02 : f32
    %32 = vector.broadcast %cst_14 : f32 to vector<4x128xf32>
    %33 = arith.maximumf %31, %32 : vector<4x128xf32>
    %34 = arith.subf %28, %33 : vector<4x128xf32>
    %35 = arith.mulf %11, %34 : vector<4x128xf32>
    %36 = arith.addf %35, %33 : vector<4x128xf32>
    %37 = arith.mulf %25, %36 : vector<4x128xf32>
    %38 = arith.addf %3, %37 : vector<4x128xf32>
    %39 = arith.addf %3, %20 : vector<4x128xf32>
    %40 = arith.addf %3, %16 : vector<4x128xf32>
    %c1_i32 = arith.constant 1 : i32
    %c0_15 = arith.constant 0 : index
    %c0_16 = arith.constant 0 : index
    %c0_17 = arith.constant 0 : index
    %41 = vector.load %arg5[%c0_15, %c0_16, %c0_17] : memref<3x4x128xf32, #tpu.memory_space<vmem>>, vector<1x4x128xf32>
    %42 = vector.shape_cast %41 : vector<1x4x128xf32> to vector<4x128xf32>
    %43 = arith.addf %42, %38 : vector<4x128xf32>
    %c0_18 = arith.constant 0 : index
    %c0_19 = arith.constant 0 : index
    %c0_20 = arith.constant 0 : index
    %44 = vector.load %arg5[%c0_18, %c0_19, %c0_20] : memref<3x4x128xf32, #tpu.memory_space<vmem>>, vector<1x4x128xf32>
    %45 = vector.shape_cast %44 : vector<1x4x128xf32> to vector<4x128xf32>
    %46 = vector.shape_cast %43 : vector<4x128xf32> to vector<1x4x128xf32>
    tpu.vector_store %arg5[%c0_18, %c0_19, %c0_20], %46 {strides = array<i32>} : memref<3x4x128xf32, #tpu.memory_space<vmem>>, vector<1x4x128xf32>,
    %c1 = arith.constant 1 : index
    %c0_21 = arith.constant 0 : index
    %c0_22 = arith.constant 0 : index
    %47 = vector.load %arg5[%c1, %c0_21, %c0_22] : memref<3x4x128xf32, #tpu.memory_space<vmem>>, vector<1x4x128xf32>
    %48 = vector.shape_cast %47 : vector<1x4x128xf32> to vector<4x128xf32>
    %49 = arith.addf %48, %39 : vector<4x128xf32>
    %c1_23 = arith.constant 1 : index
    %c0_24 = arith.constant 0 : index
    %c0_25 = arith.constant 0 : index
    %50 = vector.load %arg5[%c1_23, %c0_24, %c0_25] : memref<3x4x128xf32, #tpu.memory_space<vmem>>, vector<1x4x128xf32>
    %51 = vector.shape_cast %50 : vector<1x4x128xf32> to vector<4x128xf32>
    %52 = vector.shape_cast %49 : vector<4x128xf32> to vector<1x4x128xf32>
    tpu.vector_store %arg5[%c1_23, %c0_24, %c0_25], %52 {strides = array<i32>} : memref<3x4x128xf32, #tpu.memory_space<vmem>>, vector<1x4x128xf32>,
    %c2 = arith.constant 2 : index
    %c0_26 = arith.constant 0 : index
    %c0_27 = arith.constant 0 : index
    %53 = vector.load %arg5[%c2, %c0_26, %c0_27] : memref<3x4x128xf32, #tpu.memory_space<vmem>>, vector<1x4x128xf32>
    %54 = vector.shape_cast %53 : vector<1x4x128xf32> to vector<4x128xf32>
    %55 = arith.addf %54, %40 : vector<4x128xf32>
    %c2_28 = arith.constant 2 : index
    %c0_29 = arith.constant 0 : index
    %c0_30 = arith.constant 0 : index
    %56 = vector.load %arg5[%c2_28, %c0_29, %c0_30] : memref<3x4x128xf32, #tpu.memory_space<vmem>>, vector<1x4x128xf32>
    %57 = vector.shape_cast %56 : vector<1x4x128xf32> to vector<4x128xf32>
    %58 = vector.shape_cast %55 : vector<4x128xf32> to vector<1x4x128xf32>
    tpu.vector_store %arg5[%c2_28, %c0_29, %c0_30], %58 {strides = array<i32>} : memref<3x4x128xf32, #tpu.memory_space<vmem>>, vector<1x4x128xf32>,
    return
  }
  func.func @transform_0(%arg0: i32, %arg1: i32) -> (i32, i32) {
    %c1_i32 = arith.constant 1 : i32
    %0 = arith.muli %arg0, %c1_i32 : i32
    %1 = arith.addi %0, %arg1 : i32
    %c0_i32 = arith.constant 0 : i32
    %2 = arith.minsi %1, %c0_i32 : i32
    %c0_i32_0 = arith.constant 0 : i32
    %c0_i32_1 = arith.constant 0 : i32
    return %2, %c0_i32_0 : i32, i32
  }
  func.func @transform_1(%arg0: i32, %arg1: i32) -> (i32, i32) {
    %c1_i32 = arith.constant 1 : i32
    %0 = arith.muli %arg0, %c1_i32 : i32
    %1 = arith.addi %0, %arg1 : i32
    %c0_i32 = arith.constant 0 : i32
    %2 = arith.minsi %1, %c0_i32 : i32
    %c0_i32_0 = arith.constant 0 : i32
    %c0_i32_1 = arith.constant 0 : i32
    return %2, %c0_i32_0 : i32, i32
  }
  func.func @transform_2(%arg0: i32, %arg1: i32) -> (i32, i32) {
    %c1_i32 = arith.constant 1 : i32
    %0 = arith.muli %arg0, %c1_i32 : i32
    %1 = arith.addi %0, %arg1 : i32
    %c0_i32 = arith.constant 0 : i32
    %2 = arith.minsi %1, %c0_i32 : i32
    %c0_i32_0 = arith.constant 0 : i32
    %c0_i32_1 = arith.constant 0 : i32
    return %2, %c0_i32_0 : i32, i32
  }
  func.func @transform_3(%arg0: i32, %arg1: i32) -> (i32, i32, i32) {
    %c0_i32 = arith.constant 0 : i32
    %c0_i32_0 = arith.constant 0 : i32
    %c0_i32_1 = arith.constant 0 : i32
    return %arg0, %c0_i32, %c0_i32_0 : i32, i32, i32
  }
}

</mosaic_0001>

<llo_original>
// kernel: tpu_custom_call.1
$region0: #{tpu_custom_call.1}
  #allocation0 [shape = 'u32[]', space=smem, size = 0x4, offset = 0x4, fixed_abs, tag = 'smem constant byte address 0x4 - core index']
  #allocation1 [shape = 'u32[144,128]{1,0:T(1,128)}', space=vmem, size = 0x12000, scoped, tag = 'internal scratch']
  %s0 = inlined_call_operand.hbm [shape: f32[4,128], index: 0, kind: input, shape index: {}]
  %s1 = inlined_call_operand.hbm [shape: f32[4,128], index: 1, kind: input, shape index: {}]
  %s2 = inlined_call_operand.vmem [shape: f32[4,128], index: 2, kind: input, shape index: {}]
  %s3 = inlined_call_operand.hbm [shape: f32[3,4,128], index: 3, kind: output, shape index: {}]
  %s4 = sld [smem:[#allocation0]]
  $region34: #{tpu_custom_call.1} parent=0
    _
  %s6 = ssub.s32 1, %s4
  %s7 = scalar_select 0, %s6, %s4
  $region1: #{tpu_custom_call.1} parent=0
    #allocation2 [shape = 'u8[2048]{0}', space=vmem, size = 0x800, scoped, tag = 'input window, operand 0, single buffered']
    #allocation3 [shape = 's32[1]{0}', space=sflag, size = 0x4, scoped, tag = 'scoped memory for tpu_custom_call.1']
    #allocation4 [shape = 's32[1]{0}', space=sflag, size = 0x4, scoped, tag = 'scoped memory for tpu_custom_call.1']
    #allocation5 [shape = 'u8[2048]{0}', space=vmem, size = 0x800, scoped, tag = 'input window, operand 1, single buffered']
    #allocation6 [shape = 's32[1]{0}', space=sflag, size = 0x4, scoped, tag = 'scoped memory for tpu_custom_call.1']
    #allocation7 [shape = 'u8[6144]{0}', space=vmem, size = 0x1800, scoped, tag = 'output window, operand 0, single buffered']
    %8 = vsyncpa [#allocation3], 0
    %9 = vsyncpa [#allocation6], 0
    %10 = vsyncpa [#allocation4], 0
    // Predicated region
    $region2: #{tpu_custom_call.1} parent=1 // pred_check
      _
    $region3: #{tpu_custom_call.1} parent=1 // pred_check_branch
      %12 = sbr.rel (0) target = $region5
    $region4: #{tpu_custom_call.1} parent=1 // pred_region
      %s13 = sadd.s32 0, 0
      %p14 = scmp.lt.s32.totalorder %s13, 0
      %s15 = scalar_select %p14, %s13, 0
      %s17 = ssub.s32 64, 64
      %18 = vsyncadd [#allocation3], %s17
      %s19 = smul.addr %s15, 64
      %s20 = scalar_lea.hbm %s0, %s19
      %s22 = sshll.u32 [#allocation2], 4
      %s23 = int_to_ptr.vmem [resolvable:$true] %s22
      %25 = dma.hbm_to_vmem [thread:$0]  %s20, 64, %s23, [#allocation3]
    $region5: #{tpu_custom_call.1} parent=1 // pred_fallthru
      _
    // Predicated region
    $region6: #{tpu_custom_call.1} parent=1 // pred_check
      _
    $region7: #{tpu_custom_call.1} parent=1 // pred_check_branch
      %27 = sbr.rel (0) target = $region9
    $region8: #{tpu_custom_call.1} parent=1 // pred_region
      %s28 = sadd.s32 0, 0
      %p29 = scmp.lt.s32.totalorder %s28, 0
      %s30 = scalar_select %p29, %s28, 0
      %s32 = ssub.s32 64, 64
      %33 = vsyncadd [#allocation6], %s32
      %s34 = smul.addr %s30, 64
      %s35 = scalar_lea.hbm %s1, %s34
      %s37 = sshll.u32 [#allocation5], 4
      %s38 = int_to_ptr.vmem [resolvable:$true] %s37
      %40 = dma.hbm_to_vmem [thread:$0]  %s35, 64, %s38, [#allocation6]
    $region9: #{tpu_custom_call.1} parent=1 // pred_fallthru
      _
    // Predicated region
    $region10: #{tpu_custom_call.1} parent=1 // pred_check
      _
    $region11: #{tpu_custom_call.1} parent=1 // pred_check_branch
      %42 = sbr.rel (0) target = $region13
    $region12: #{tpu_custom_call.1} parent=1 // pred_region
      %s43 = sadd.s32 0, 0
      %p44 = scmp.lt.s32.totalorder %s43, 0
      %s45 = scalar_select %p44, %s43, 0
      %p46 = scmp.lt.s32.totalorder %s45, 0
      %s47 = scalar_select %p46, %s45, 0
      %s48 = smul.addr %s47, 4
      %s49 = scalar_lea.vmem %s2, %s48
      %s50 = sadd.s32 0, 0
      %p51 = scmp.lt.s32.totalorder %s50, 0
      %s52 = scalar_select %p51, %s50, 0
    $region13: #{tpu_custom_call.1} parent=1 // pred_fallthru
      _
    // Predicated region
    $region14: #{tpu_custom_call.1} parent=1 // pred_check
      _
    $region15: #{tpu_custom_call.1} parent=1 // pred_check_branch
      %54 = sbr.rel (0) target = $region17
    $region16: #{tpu_custom_call.1} parent=1 // pred_region
      %55 = dma.done [#allocation3], 64
    $region17: #{tpu_custom_call.1} parent=1 // pred_fallthru
      _
    // Predicated region
    $region18: #{tpu_custom_call.1} parent=1 // pred_check
      _
    $region19: #{tpu_custom_call.1} parent=1 // pred_check_branch
      %57 = sbr.rel (0) target = $region21
    $region20: #{tpu_custom_call.1} parent=1 // pred_region
      %58 = dma.done [#allocation6], 64
    $region21: #{tpu_custom_call.1} parent=1 // pred_fallthru
      _
    %s59 = sadd.s32 0, 0
    %p60 = scmp.lt.s32.totalorder %s59, 0
    %s61 = scalar_select %p60, %s59, 0
    %p62 = scmp.lt.s32.totalorder %s61, 0
    %s63 = scalar_select %p62, %s61, 0
    %s64 = smul.addr %s63, 4
    %s65 = scalar_lea.vmem %s2, %s64
    %s66 = sadd.s32 0, 0
    %p67 = scmp.lt.s32.totalorder %s66, 0
    %s68 = scalar_select %p67, %s66, 0
    %s69 = sadd.s32 0, 0
    %p70 = scmp.lt.s32.totalorder %s69, 0
    %s71 = scalar_select %p70, %s69, 0
    %s72 = sadd.s32 0, 0
    %p73 = scmp.lt.s32.totalorder %s72, 0
    %s74 = scalar_select %p73, %s72, 0
    %p75 = scmp.lt.s32.totalorder %s74, 0
    %s76 = scalar_select %p75, %s74, 0
    %s77 = smul.addr %s76, 4
    %s78 = scalar_lea.vmem %s2, %s77
    %s79 = sadd.s32 0, 0
    %p80 = scmp.lt.s32.totalorder %s79, 0
    %s81 = scalar_select %p80, %s79, 0
    %p82 = scmp.eq.s32.totalorder 0, 0
    // Predicated region
    $region22: #{tpu_custom_call.1} parent=1 // pred_check
      %p83 = pneg %p82
    $region23: #{tpu_custom_call.1} parent=1 // pred_check_branch
      %85 = sbr.rel (%p83) target = $region25
    $region24: #{tpu_custom_call.1} parent=1 // pred_region
      %86 = vst [vmem:[#allocation7] sm:$0xf] 0.0
      %87 = vst [vmem:[#allocation7 + $0x4] sm:$0xf] 0.0
      %88 = vst [vmem:[#allocation7 + $0x8] sm:$0xf] 0.0
    $region25: #{tpu_custom_call.1} parent=1 // pred_fallthru
      _
    %v89 = vld [vmem:[#allocation2] sm:$0xf]
    %v90 = vld [vmem:[#allocation5] sm:$0xf]
    %v91 = vld [vmem:[%s78] sm:$0xf]
    %vm92 = vcmp.eq.f32.partialorder %v90, 1.0
    %v93 = vsel %vm92, 1.0, 0.0
    %vm94 = vcmp.ge.f32.partialorder %v89, 0.5
    %v95 = vsel %vm94, %v93, 0.0
    %vm96 = vcmp.gt.f32.partialorder %v91, 0.5
    %v97 = vsel %vm96, -10.0, -1.0
    %v98 = vlog2.pop %v89
    %v99 = vmul.f32 %v98, 0.6931472
    %v100 = vmax.f32 %v99, -100.0
    %v101 = vsub.f32 1.0, %v89
    %v102 = vlog2.pop %v101
    %v103 = vmul.f32 %v102, 0.6931472
    %v104 = vmax.f32 %v103, -100.0
    %v105 = vsub.f32 %v100, %v104
    %v106 = vmul.f32 %v91, %v105
    %v107 = vadd.f32 %v106, %v104
    %v108 = vmul.f32 %v97, %v107
    %v109 = vadd.f32 %v108, 0.0
    %v110 = vadd.f32 %v95, 0.0
    %v111 = vadd.f32 %v93, 0.0
    %v112 = vld [vmem:[#allocation7] sm:$0xf]
    %v113 = vadd.f32 %v112, %v109
    %114 = vst [vmem:[#allocation7] sm:$0xf] %v113
    %s115 = scalar_lea.vmem [#allocation7], 4
    %v116 = vld [vmem:[%s115] sm:$0xf]
    %v117 = vadd.f32 %v116, %v110
    %118 = vst [vmem:[%s115] sm:$0xf] %v117
    %s119 = scalar_lea.vmem [#allocation7], 8
    %v120 = vld [vmem:[%s119] sm:$0xf]
    %v121 = vadd.f32 %v120, %v111
    %122 = vst [vmem:[%s119] sm:$0xf] %v121
    // Predicated region
    $region26: #{tpu_custom_call.1} parent=1 // pred_check
      _
    $region27: #{tpu_custom_call.1} parent=1 // pred_check_branch
      %124 = sbr.rel (0) target = $region29
    $region28: #{tpu_custom_call.1} parent=1 // pred_region
      %s126 = ssub.s32 192, 192
      %127 = vsyncadd [#allocation4], %s126
      %s128 = sshll.u32 [#allocation7], 4
      %s129 = int_to_ptr.vmem [resolvable:$true] %s128
      %134 = dma.vmem_to_hbm [thread:$0]  %s129, 192, %s3, [#allocation4], 64, 64, 4
    $region29: #{tpu_custom_call.1} parent=1 // pred_fallthru
      _
    // Predicated region
    $region30: #{tpu_custom_call.1} parent=1 // pred_check
      _
    $region31: #{tpu_custom_call.1} parent=1 // pred_check_branch
      %136 = sbr.rel (0) target = $region33
    $region32: #{tpu_custom_call.1} parent=1 // pred_region
      %137 = dma.done [#allocation4], 192
    $region33: #{tpu_custom_call.1} parent=1 // pred_fallthru
      _
    %138 = vsyncpa [#allocation3], 1
    %139 = vsyncpa [#allocation6], 1
    %140 = vsyncpa [#allocation4], 1

</llo_original>
